<compile_context>
chip_gen: v6e
topology: v6e:2x2x1
jax: 0.10.0
libtpu: 0.0.40
codegen_flags: <defaults>
</compile_context>

<pallas_src>
import jax
import jax.numpy as jnp
from jax import lax
from jax.experimental import pallas as pl
from jax.experimental.pallas import tpu as pltpu


def _round_up(x, m):
    return (x + m - 1) // m * m


def _cdiv(a, b):
    return -(-a // b)


def _choose_bb(B, block_b=2048):
    """Pick a batch tile bb (multiple of 128, lane dim) and padded batch Bp."""
    Bp_min = _round_up(B, 128)
    block_b = max(128, _round_up(block_b, 128))
    n_tiles = max(1, _cdiv(Bp_min, block_b))
    # v7x has 2 TensorCores: give the parallel axis >= 2 tiles when there is
    # enough work (no effect on v5e/v6e which have a single TC).
    if n_tiles == 1 and Bp_min >= 256:
        n_tiles = 2
    bb = _round_up(_cdiv(Bp_min, n_tiles), 128)
    Bp = bb * _cdiv(Bp_min, bb)
    return bb, Bp


# ----------------------------------------------------------------------------
# Parameter init / packing
# ----------------------------------------------------------------------------
def init_params(key, latent_dim, hidden=50, dtype=jnp.float32):
    # PyTorch nn.Linear init: U(-1/sqrt(fan_in), 1/sqrt(fan_in)).
    k1, k2, k3, k4 = jax.random.split(key, 4)
    bound1 = 1.0 / jnp.sqrt(latent_dim)
    bound2 = 1.0 / jnp.sqrt(hidden)
    w1 = jax.random.uniform(k1, (latent_dim, hidden), dtype, -bound1, bound1)
    b1 = jax.random.uniform(k2, (hidden,), dtype, -bound1, bound1)
    w2 = jax.random.uniform(k3, (hidden, latent_dim), dtype, -bound2, bound2)
    b2 = jax.random.uniform(k4, (latent_dim,), dtype, -bound2, bound2)
    return w1, b1, w2, b2


def pack_params(w1, b1, w2, b2, hidden_pad=56, dtype=jnp.float32):
    """Feature-major (transposed) packing with the hidden dim zero-padded to a
    multiple of 8 (sublane).  Exact: tanh(0)=0 and zero w2 columns add 0."""
    d_in, h = w1.shape
    d_out = w2.shape[1]
    hp = _round_up(max(h, hidden_pad), 8)
    w1t = jnp.zeros((hp, d_in), dtype).at[:h, :].set(w1.T.astype(dtype))   # (Hp, D)
    b1t = jnp.zeros((hp, 1), dtype).at[:h, 0].set(b1.astype(dtype))        # (Hp, 1)
    w2t = jnp.zeros((d_out, hp), dtype).at[:, :h].set(w2.T.astype(dtype))  # (D, Hp)
    b2t = b2.astype(dtype).reshape(d_out, 1)                               # (D, 1)
    return w1t, b1t, w2t, b2t


# ----------------------------------------------------------------------------
# Single evaluation: f(t, z) = Linear -> Tanh -> Linear   (feature-major)
# ----------------------------------------------------------------------------
def odefunc_kernel(zt_ref, w1t_ref, b1t_ref, w2t_ref, b2t_ref, out_ref):
    z = zt_ref[...].astype(jnp.float32)                                    # (D, bb)
    h = jnp.tanh(
        jnp.dot(w1t_ref[...], z, preferred_element_type=jnp.float32)
        + b1t_ref[...])                                                    # (Hp, bb)
    dz = jnp.dot(w2t_ref[...], h, preferred_element_type=jnp.float32) + b2t_ref[...]
    out_ref[...] = dz.astype(out_ref.dtype)                                # (D, bb)


def ode_func(t, z, params, *, block_b=2048):
    """Forward pass of ODEFunc. `t` is ignored (as in the PyTorch module)."""
    del t
    w1t, b1t, w2t, b2t = params
    B, D = z.shape
    bb, Bp = _choose_bb(B, block_b)
    zt = jnp.zeros((D, Bp), z.dtype).at[:, :B].set(z.T)      # one-time transpose

    out_t = pl.pallas_call(
        odefunc_kernel,
        out_shape=jax.ShapeDtypeStruct((D, Bp), z.dtype),
        grid=(Bp // bb,),
        in_specs=[
            pl.BlockSpec((D, bb), lambda i: (0, i)),
            # Constant index_maps: weights/biases are grid-invariant, DMA'd
            # into VMEM once and kept resident across batch tiles.
            pl.BlockSpec(w1t.shape, lambda i: (0, 0)),
            pl.BlockSpec(b1t.shape, lambda i: (0, 0)),
            pl.BlockSpec(w2t.shape, lambda i: (0, 0)),
            pl.BlockSpec(b2t.shape, lambda i: (0, 0)),
        ],
        out_specs=pl.BlockSpec((D, bb), lambda i: (0, i)),
        compiler_params=pltpu.CompilerParams(dimension_semantics=("parallel",)),
    )(zt, w1t, b1t, w2t, b2t)
    return out_t[:, :B].T


# ----------------------------------------------------------------------------
# Fused solver: ALL Euler steps inside one kernel via an in-body fori_loop.
# Grid = (batch_tiles,); weights resident in VMEM; state carried as loop value.
# ----------------------------------------------------------------------------
def make_fused_euler_kernel(num_steps, unroll=4, matmul_dtype=jnp.float32):
    num_steps = int(num_steps)
    unroll = max(1, min(int(unroll), max(1, num_steps)))

    def kernel(z0_ref, w1t_ref, b1t_ref, w2t_ref, b2t_ref, out_ref):
        bb = z0_ref.shape[1]
        # Hoist step-invariant loads / casts / bias broadcasts above the loop.
        w1 = w1t_ref[...].astype(matmul_dtype)                # (Hp, D)
        w2 = w2t_ref[...].astype(matmul_dtype)                # (D, Hp)  (dt folded)
        b1 = jnp.broadcast_to(b1t_ref[...], (w1.shape[0], bb)).astype(jnp.float32)
        b2 = jnp.broadcast_to(b2t_ref[...], (w2.shape[0], bb)).astype(jnp.float32)
        z0 = z0_ref[...].astype(jnp.float32)                  # (D, bb)

        def step(_, z):
            h = jnp.tanh(
                jnp.dot(w1, z.astype(matmul_dtype),
                        preferred_element_type=jnp.float32) + b1)
            dz = jnp.dot(w2, h.astype(matmul_dtype),
                         preferred_element_type=jnp.float32) + b2
            return z + dz                                     # dt already in w2/b2

        zT = lax.fori_loop(0, num_steps, step, z0, unroll=unroll)
        out_ref[...] = zT.astype(out_ref.dtype)

    return kernel


def ode_integrate_euler(z0, params, *, dt, num_steps, block_b=2048,
                        matmul_dtype=jnp.float32):
    """z_{k+1} = z_k + dt * f(t_k, z_k); the whole loop runs in one pallas_call.
    Use matmul_dtype=jnp.bfloat16 on v6e/v7x if solver tolerances allow."""
    w1t, b1t, w2t, b2t = params
    dt = jnp.asarray(dt, jnp.float32)
    w2t_dt = w2t * dt                                         # fold dt into layer 2
    b2t_dt = b2t * dt
    B, D = z0.shape
    bb, Bp = _choose_bb(B, block_b)
    z_in = jnp.zeros((D, Bp), z0.dtype).at[:, :B].set(z0.T)

    out_t = pl.pallas_call(
        make_fused_euler_kernel(num_steps, unroll=4, matmul_dtype=matmul_dtype),
        out_shape=jax.ShapeDtypeStruct((D, Bp), z0.dtype),
        grid=(Bp // bb,),
        in_specs=[
            pl.BlockSpec((D, bb), lambda i: (0, i)),          # z0: once per tile
            pl.BlockSpec(w1t.shape, lambda i: (0, 0)),        # weights: resident
            pl.BlockSpec(b1t.shape, lambda i: (0, 0)),
            pl.BlockSpec(w2t_dt.shape, lambda i: (0, 0)),
            pl.BlockSpec(b2t_dt.shape, lambda i: (0, 0)),
        ],
        out_specs=pl.BlockSpec((D, bb), lambda i: (0, i)),
        compiler_params=pltpu.CompilerParams(dimension_semantics=("parallel",)),
    )(z_in, w1t, b1t, w2t_dt, b2t_dt)
    return out_t[:, :B].T


# ----------------------------------------------------------------------------
if __name__ == "__main__":
    latent_dim = 32
    hidden = 50
    batch = 8

    key = jax.random.PRNGKey(0)
    kz, kp = jax.random.split(key)

    z = jax.random.normal(kz, (batch, latent_dim), jnp.float32)
    t = jnp.float32(0.0)  # unused by the forward pass (matches the PyTorch module)

    w1, b1, w2, b2 = init_params(kp, latent_dim, hidden)
    params = pack_params(w1, b1, w2, b2)

    # --- single forward evaluation f(t, z) ----------------------------------
    out = jax.block_until_ready(ode_func(t, z, params))
    ref = jnp.tanh(z @ w1 + b1) @ w2 + b2
    assert out.shape == (batch, latent_dim)
    assert jnp.allclose(out, ref, atol=1e-5, rtol=1e-5)

    # --- fused multi-step evaluation (solver loop inside one kernel) --------
    num_steps, dt = 16, 1.0 / 16.0
    z_T = jax.block_until_ready(
        ode_integrate_euler(z, params, dt=dt, num_steps=num_steps))
    z_chk = z
    for _ in range(num_steps):
        z_chk = z_chk + dt * (jnp.tanh(z_chk @ w1 + b1) @ w2 + b2)
    assert z_T.shape == (batch, latent_dim)
    assert jnp.allclose(z_T, z_chk, atol=1e-4, rtol=1e-4)

    print("KERNEL_OK")
</pallas_src>

<mosaic_0001>
module attributes {stable_mosaic.version = 11 : i64} {
  func.func @odefunc_kernel(%arg0: i32, %arg1: memref<32x128xf32, #tpu.memory_space<vmem>>, %arg2: memref<56x32xf32, #tpu.memory_space<vmem>>, %arg3: memref<56x1xf32, #tpu.memory_space<vmem>>, %arg4: memref<32x56xf32, #tpu.memory_space<vmem>>, %arg5: memref<32x1xf32, #tpu.memory_space<vmem>>, %arg6: memref<32x128xf32, #tpu.memory_space<vmem>>) attributes {dimension_semantics = [#tpu.dimension_semantics<parallel>], iteration_bounds = array<i64: 1>, scalar_prefetch = 0 : i64, scratch_operands = 0 : i64, tpu.core_type = #tpu.core_type<tc>, window_params = [{transform_indices = @transform_0, window_bounds = array<i64: 32, 128>}, {pipeline_mode = #tpu.pipeline_mode<synchronous>, transform_indices = @transform_1, window_bounds = array<i64: 56, 32>}, {pipeline_mode = #tpu.pipeline_mode<synchronous>, transform_indices = @transform_2, window_bounds = array<i64: 56, 1>}, {pipeline_mode = #tpu.pipeline_mode<synchronous>, transform_indices = @transform_3, window_bounds = array<i64: 32, 56>}, {pipeline_mode = #tpu.pipeline_mode<synchronous>, transform_indices = @transform_4, window_bounds = array<i64: 32, 1>}, {transform_indices = @transform_5, window_bounds = array<i64: 32, 128>}]} {
    %c0 = arith.constant 0 : index
    %c0_0 = arith.constant 0 : index
    %0 = vector.load %arg1[%c0, %c0_0] : memref<32x128xf32, #tpu.memory_space<vmem>>, vector<32x128xf32>
    %c0_1 = arith.constant 0 : index
    %c0_2 = arith.constant 0 : index
    %1 = vector.load %arg2[%c0_1, %c0_2] : memref<56x32xf32, #tpu.memory_space<vmem>>, vector<56x32xf32>
    %cst = arith.constant dense<0.000000e+00> : vector<56x128xf32>
    %2 = tpu.matmul %1, %0, %cst {dimension_numbers = #tpu.dot_dimension_numbers<[1], [0], [0], [1], [0, 0, 1, 1], [], []>} : vector<56x32xf32>, vector<32x128xf32>, vector<56x128xf32> -> vector<56x128xf32>
    %c0_3 = arith.constant 0 : index
    %c0_4 = arith.constant 0 : index
    %3 = vector.load %arg3[%c0_3, %c0_4] : memref<56x1xf32, #tpu.memory_space<vmem>>, vector<56x1xf32>
    %4 = vector.broadcast %3 : vector<56x1xf32> to vector<56x128xf32>
    %5 = arith.addf %2, %4 : vector<56x128xf32>
    %6 = math.tanh %5 : vector<56x128xf32>
    %c0_5 = arith.constant 0 : index
    %c0_6 = arith.constant 0 : index
    %7 = vector.load %arg4[%c0_5, %c0_6] : memref<32x56xf32, #tpu.memory_space<vmem>>, vector<32x56xf32>
    %cst_7 = arith.constant dense<0.000000e+00> : vector<32x128xf32>
    %8 = tpu.matmul %7, %6, %cst_7 {dimension_numbers = #tpu.dot_dimension_numbers<[1], [0], [0], [1], [0, 0, 1, 1], [], []>} : vector<32x56xf32>, vector<56x128xf32>, vector<32x128xf32> -> vector<32x128xf32>
    %c0_8 = arith.constant 0 : index
    %c0_9 = arith.constant 0 : index
    %9 = vector.load %arg5[%c0_8, %c0_9] : memref<32x1xf32, #tpu.memory_space<vmem>>, vector<32x1xf32>
    %10 = vector.broadcast %9 : vector<32x1xf32> to vector<32x128xf32>
    %11 = arith.addf %8, %10 : vector<32x128xf32>
    %c0_10 = arith.constant 0 : index
    %c0_11 = arith.constant 0 : index
    %12 = vector.load %arg6[%c0_10, %c0_11] : memref<32x128xf32, #tpu.memory_space<vmem>>, vector<32x128xf32>
    tpu.vector_store %arg6[%c0_10, %c0_11], %11 {strides = array<i32>} : memref<32x128xf32, #tpu.memory_space<vmem>>, vector<32x128xf32>,
    return
  }
  func.func @transform_0(%arg0: i32) -> (i32, i32) {
    %c0_i32 = arith.constant 0 : i32
    %c0_i32_0 = arith.constant 0 : i32
    return %c0_i32, %arg0 : i32, i32
  }
  func.func @transform_1(%arg0: i32) -> (i32, i32) {
    %c0_i32 = arith.constant 0 : i32
    %c0_i32_0 = arith.constant 0 : i32
    %c0_i32_1 = arith.constant 0 : i32
    return %c0_i32, %c0_i32_0 : i32, i32
  }
  func.func @transform_2(%arg0: i32) -> (i32, i32) {
    %c0_i32 = arith.constant 0 : i32
    %c0_i32_0 = arith.constant 0 : i32
    %c0_i32_1 = arith.constant 0 : i32
    return %c0_i32, %c0_i32_0 : i32, i32
  }
  func.func @transform_3(%arg0: i32) -> (i32, i32) {
    %c0_i32 = arith.constant 0 : i32
    %c0_i32_0 = arith.constant 0 : i32
    %c0_i32_1 = arith.constant 0 : i32
    return %c0_i32, %c0_i32_0 : i32, i32
  }
  func.func @transform_4(%arg0: i32) -> (i32, i32) {
    %c0_i32 = arith.constant 0 : i32
    %c0_i32_0 = arith.constant 0 : i32
    %c0_i32_1 = arith.constant 0 : i32
    return %c0_i32, %c0_i32_0 : i32, i32
  }
  func.func @transform_5(%arg0: i32) -> (i32, i32) {
    %c0_i32 = arith.constant 0 : i32
    %c0_i32_0 = arith.constant 0 : i32
    return %c0_i32, %arg0 : i32, i32
  }
}

</mosaic_0001>

<llo_original>
// kernel: tpu_custom_call.1
$region0: #{tpu_custom_call.1}
  #allocation0 [shape = 'u32[]', space=smem, size = 0x4, offset = 0x4, fixed_abs, tag = 'smem constant byte address 0x4 - core index']
  #allocation1 [shape = 'u32[144,128]{1,0:T(1,128)}', space=vmem, size = 0x12000, scoped, tag = 'internal scratch']
  %s0 = inlined_call_operand.vmem [shape: f32[32,128], index: 0, kind: input, shape index: {}]
  %s1 = inlined_call_operand.vmem [shape: f32[56,32], index: 1, kind: input, shape index: {}]
  %s2 = inlined_call_operand.vmem [shape: f32[56,1], index: 2, kind: input, shape index: {}]
  %s3 = inlined_call_operand.vmem [shape: f32[32,56], index: 3, kind: input, shape index: {}]
  %s4 = inlined_call_operand.vmem [shape: f32[32,1], index: 4, kind: input, shape index: {}]
  %s5 = inlined_call_operand.hbm [shape: f32[32,128], index: 5, kind: output, shape index: {}]
  %s6 = sld [smem:[#allocation0]]
  $region30: #{tpu_custom_call.1} parent=0
    _
  %s8 = ssub.s32 1, %s6
  %s9 = scalar_select 0, %s8, %s6
  $region1: #{tpu_custom_call.1} parent=0
    #allocation2 [shape = 'u8[16384]{0}', space=vmem, size = 0x4000, scoped, tag = 'output window, operand 0, single buffered']
    #allocation3 [shape = 's32[1]{0}', space=sflag, size = 0x4, scoped, tag = 'scoped memory for tpu_custom_call.1']
    %10 = vsyncpa [#allocation3], 0
    // Predicated region
    $region2: #{tpu_custom_call.1} parent=1 // pred_check
      _
    $region3: #{tpu_custom_call.1} parent=1 // pred_check_branch
      %12 = sbr.rel (0) target = $region5
    $region4: #{tpu_custom_call.1} parent=1 // pred_region
      _
    $region5: #{tpu_custom_call.1} parent=1 // pred_fallthru
      _
    // Predicated region
    $region6: #{tpu_custom_call.1} parent=1 // pred_check
      _
    $region7: #{tpu_custom_call.1} parent=1 // pred_check_branch
      %14 = sbr.rel (0) target = $region9
    $region8: #{tpu_custom_call.1} parent=1 // pred_region
      _
    $region9: #{tpu_custom_call.1} parent=1 // pred_fallthru
      _
    // Predicated region
    $region10: #{tpu_custom_call.1} parent=1 // pred_check
      _
    $region11: #{tpu_custom_call.1} parent=1 // pred_check_branch
      %16 = sbr.rel (0) target = $region13
    $region12: #{tpu_custom_call.1} parent=1 // pred_region
      _
    $region13: #{tpu_custom_call.1} parent=1 // pred_fallthru
      _
    // Predicated region
    $region14: #{tpu_custom_call.1} parent=1 // pred_check
      _
    $region15: #{tpu_custom_call.1} parent=1 // pred_check_branch
      %18 = sbr.rel (0) target = $region17
    $region16: #{tpu_custom_call.1} parent=1 // pred_region
      _
    $region17: #{tpu_custom_call.1} parent=1 // pred_fallthru
      _
    // Predicated region
    $region18: #{tpu_custom_call.1} parent=1 // pred_check
      _
    $region19: #{tpu_custom_call.1} parent=1 // pred_check_branch
      %20 = sbr.rel (0) target = $region21
    $region20: #{tpu_custom_call.1} parent=1 // pred_region
      _
    $region21: #{tpu_custom_call.1} parent=1 // pred_fallthru
      _
    %v21 = vld [vmem:[%s0] sm:$0xff]
    %v22 = vld [vmem:[%s0 + $0x8] sm:$0xff]
    %v23 = vld [vmem:[%s0 + $0x10] sm:$0xff]
    %v24 = vld [vmem:[%s0 + $0x18] sm:$0xff]
    %v25 = vld [vmem:[%s1] sm:$0xff]
    %v26 = vld [vmem:[%s1 + $0x8] sm:$0xff]
    %v27 = vld [vmem:[%s1 + $0x10] sm:$0xff]
    %v28 = vld [vmem:[%s1 + $0x18] sm:$0xff]
    %v29 = vld [vmem:[%s1 + $0x20] sm:$0xff]
    %v30 = vld [vmem:[%s1 + $0x28] sm:$0xff]
    %v31 = vld [vmem:[%s1 + $0x30] sm:$0xff]
    %v32 = vld [vmem:[%s2] sm:$0xff]
    %v33 = vld [vmem:[%s2 + $0x8] sm:$0xff]
    %v34 = vld [vmem:[%s2 + $0x10] sm:$0xff]
    %v35 = vld [vmem:[%s2 + $0x18] sm:$0xff]
    %v36 = vld [vmem:[%s2 + $0x20] sm:$0xff]
    %v37 = vld [vmem:[%s2 + $0x28] sm:$0xff]
    %v38 = vld [vmem:[%s2 + $0x30] sm:$0xff]
    %40 = vset.pattern.permute.xlu0 0
    %41 = vperm.xlu0 %40, %v32
    %v42 = vpop.permute.xlu0 %41
    %45 = vset.pattern.permute.xlu0 0
    %46 = vperm.xlu0 %45, %v33
    %v47 = vpop.permute.xlu0 %46
    %50 = vset.pattern.permute.xlu0 0
    %51 = vperm.xlu0 %50, %v34
    %v52 = vpop.permute.xlu0 %51
    %55 = vset.pattern.permute.xlu0 0
    %56 = vperm.xlu0 %55, %v35
    %v57 = vpop.permute.xlu0 %56
    %60 = vset.pattern.permute.xlu0 0
    %61 = vperm.xlu0 %60, %v36
    %v62 = vpop.permute.xlu0 %61
    %65 = vset.pattern.permute.xlu0 0
    %66 = vperm.xlu0 %65, %v37
    %v67 = vpop.permute.xlu0 %66
    %70 = vset.pattern.permute.xlu0 0
    %71 = vperm.xlu0 %70, %v38
    %v72 = vpop.permute.xlu0 %71
    %vm74 = vcmask 261120
    %v76 = vsel %vm74, %v25, 0
    %v79 = vsel %vm74, %v26, 0
    %v82 = vsel %vm74, %v27, 0
    %v85 = vsel %vm74, %v28, 0
    %v88 = vsel %vm74, %v29, 0
    %v91 = vsel %vm74, %v30, 0
    %v94 = vsel %vm74, %v31, 0
    %96 = vmatprep.subr.mxu0 0.0
    %97 = vmatpush1.msra.mxu0 0.0
    %98 = vmatprep.subr.mxu0 0.0
    %99 = vmatpush1.msra.mxu0 0.0
    %100 = vmatprep.subr.mxu0 0.0
    %101 = vmatpush1.msra.mxu0 0.0
    %102 = vmatprep.subr.mxu0 0.0
    %103 = vmatpush1.msra.mxu0 0.0
    %104 = vmatprep.subr.mxu0 0.0
    %105 = vmatpush1.msra.mxu0 0.0
    %106 = vmatprep.subr.mxu0 0.0
    %107 = vmatpush1.msra.mxu0 0.0
    %108 = vmatprep.subr.mxu0 0.0
    %109 = vmatpush1.msra.mxu0 0.0
    %110 = vmatprep.subr.mxu0 0.0
    %111 = vmatpush1.msra.mxu0 0.0
    %112 = vmatprep.subr.mxu0 0.0
    %113 = vmatpush1.msra.mxu0 0.0
    %114 = vmatprep.subr.mxu0 0.0
    %115 = vmatpush1.msra.mxu0 0.0
    %116 = vmatprep.subr.mxu0 0.0
    %117 = vmatpush1.msra.mxu0 0.0
    %118 = vmatprep.subr.mxu0 0.0
    %119 = vmatpush1.msra.mxu0 0.0
    %120 = vmatprep.subr.mxu0 0.0
    %121 = vmatpush1.msra.mxu0 %v24
    %122 = vmatprep.subr.mxu0 0.0
    %123 = vmatpush1.msra.mxu0 %v23
    %124 = vmatprep.subr.mxu0 0.0
    %125 = vmatpush1.msra.mxu0 %v22
    %126 = vmatprep.subr.mxu0 0.0
    %127 = vmatpush1.msra.mxu0 %v21
    %128 = vmatprep.subr.mxu0 0.0
    %129 = vmatpush2.msra.mxu0 0.0
    %130 = vmatprep.subr.mxu0 0.0
    %131 = vmatpush2.msra.mxu0 0.0
    %132 = vmatprep.subr.mxu0 0.0
    %133 = vmatpush2.msra.mxu0 0.0
    %134 = vmatprep.subr.mxu0 0.0
    %135 = vmatpush2.msra.mxu0 0.0
    %136 = vmatprep.subr.mxu0 0.0
    %137 = vmatpush2.msra.mxu0 0.0
    %138 = vmatprep.subr.mxu0 0.0
    %139 = vmatpush2.msra.mxu0 0.0
    %140 = vmatprep.subr.mxu0 0.0
    %141 = vmatpush2.msra.mxu0 0.0
    %142 = vmatprep.subr.mxu0 0.0
    %143 = vmatpush2.msra.mxu0 0.0
    %144 = vmatprep.subr.mxu0 0.0
    %145 = vmatpush2.msra.mxu0 0.0
    %146 = vmatprep.subr.mxu0 0.0
    %147 = vmatpush2.msra.mxu0 0.0
    %148 = vmatprep.subr.mxu0 0.0
    %149 = vmatpush2.msra.mxu0 0.0
    %150 = vmatprep.subr.mxu0 0.0
    %151 = vmatpush2.msra.mxu0 0.0
    %152 = vmatprep.subr.mxu0 0.0
    %153 = vmatpush2.msra.mxu0 0.0
    %154 = vmatprep.subr.mxu0 0.0
    %155 = vmatpush2.msra.mxu0 0.0
    %156 = vmatprep.subr.mxu0 0.0
    %157 = vmatpush2.msra.mxu0 0.0
    %158 = vmatprep.subr.mxu0 0.0
    %159 = vmatpush2.msra.mxu0 0.0
    %160 = vmatprep.mubr.f32.mxu0 0.0
    %161 = vmatmul.mubr.f32.gmra.mxu0 %v76
    %v162 = vpop.f32.mrf.mxu0
    %v163 = vadd.f32 %v42, %v162
    %v164 = vpop.f32.mrf.mxu0
    %165 = vmatprep.mubr.f32.mxu0 0.0
    %166 = vmatmul.mubr.f32.gmra.mxu0 %v79
    %v167 = vpop.f32.mrf.mxu0
    %v168 = vadd.f32 %v47, %v167
    %v169 = vpop.f32.mrf.mxu0
    %170 = vmatprep.mubr.f32.mxu0 0.0
    %171 = vmatmul.mubr.f32.gmra.mxu0 %v82
    %v172 = vpop.f32.mrf.mxu0
    %v173 = vadd.f32 %v52, %v172
    %v174 = vpop.f32.mrf.mxu0
    %175 = vmatprep.mubr.f32.mxu0 0.0
    %176 = vmatmul.mubr.f32.gmra.mxu0 %v85
    %v177 = vpop.f32.mrf.mxu0
    %v178 = vadd.f32 %v57, %v177
    %v179 = vpop.f32.mrf.mxu0
    %180 = vmatprep.mubr.f32.mxu0 0.0
    %181 = vmatmul.mubr.f32.gmra.mxu0 %v88
    %v182 = vpop.f32.mrf.mxu0
    %v183 = vadd.f32 %v62, %v182
    %v184 = vpop.f32.mrf.mxu0
    %185 = vmatprep.mubr.f32.mxu0 0.0
    %186 = vmatmul.mubr.f32.gmra.mxu0 %v91
    %v187 = vpop.f32.mrf.mxu0
    %v188 = vadd.f32 %v67, %v187
    %v189 = vpop.f32.mrf.mxu0
    %190 = vmatprep.mubr.f32.mxu0 0.0
    %191 = vmatmul.mubr.f32.gmra.mxu0 %v94
    %v192 = vpop.f32.mrf.mxu0
    %v193 = vadd.f32 %v72, %v192
    %v194 = vpop.f32.mrf.mxu0
    %195 = vdwg.mxu0
    %v196 = vtanh.pop %v163
    %v197 = vtanh.pop %v168
    %v198 = vtanh.pop %v173
    %v199 = vtanh.pop %v178
    %v200 = vtanh.pop %v183
    %v201 = vtanh.pop %v188
    %v202 = vtanh.pop %v193
    %v203 = vld [vmem:[%s3] sm:$0xff]
    %v204 = vld [vmem:[%s3 + $0x8] sm:$0xff]
    %v205 = vld [vmem:[%s3 + $0x10] sm:$0xff]
    %v206 = vld [vmem:[%s3 + $0x18] sm:$0xff]
    %v207 = vld [vmem:[%s4] sm:$0xff]
    %v208 = vld [vmem:[%s4 + $0x8] sm:$0xff]
    %v209 = vld [vmem:[%s4 + $0x10] sm:$0xff]
    %v210 = vld [vmem:[%s4 + $0x18] sm:$0xff]
    %212 = vset.pattern.permute.xlu0 0
    %213 = vperm.xlu0 %212, %v207
    %v214 = vpop.permute.xlu0 %213
    %217 = vset.pattern.permute.xlu0 0
    %218 = vperm.xlu0 %217, %v208
    %v219 = vpop.permute.xlu0 %218
    %222 = vset.pattern.permute.xlu0 0
    %223 = vperm.xlu0 %222, %v209
    %v224 = vpop.permute.xlu0 %223
    %227 = vset.pattern.permute.xlu0 0
    %228 = vperm.xlu0 %227, %v210
    %v229 = vpop.permute.xlu0 %228
    %vm231 = vcmask 457728
    %v233 = vsel %vm231, %v203, 0
    %v236 = vsel %vm231, %v204, 0
    %v239 = vsel %vm231, %v205, 0
    %v242 = vsel %vm231, %v206, 0
    %244 = vmatprep.subr.mxu0 0.0
    %245 = vmatpush1.msra.mxu0 0.0
    %246 = vmatprep.subr.mxu0 0.0
    %247 = vmatpush1.msra.mxu0 0.0
    %248 = vmatprep.subr.mxu0 0.0
    %249 = vmatpush1.msra.mxu0 0.0
    %250 = vmatprep.subr.mxu0 0.0
    %251 = vmatpush1.msra.mxu0 0.0
    %252 = vmatprep.subr.mxu0 0.0
    %253 = vmatpush1.msra.mxu0 0.0
    %254 = vmatprep.subr.mxu0 0.0
    %255 = vmatpush1.msra.mxu0 0.0
    %256 = vmatprep.subr.mxu0 0.0
    %257 = vmatpush1.msra.mxu0 0.0
    %258 = vmatprep.subr.mxu0 0.0
    %259 = vmatpush1.msra.mxu0 0.0
    %260 = vmatprep.subr.mxu0 0.0
    %261 = vmatpush1.msra.mxu0 0.0
    %262 = vmatprep.subr.mxu0 0.0
    %263 = vmatpush1.msra.mxu0 %v202
    %264 = vmatprep.subr.mxu0 0.0
    %265 = vmatpush1.msra.mxu0 %v201
    %266 = vmatprep.subr.mxu0 0.0
    %267 = vmatpush1.msra.mxu0 %v200
    %268 = vmatprep.subr.mxu0 0.0
    %269 = vmatpush1.msra.mxu0 %v199
    %270 = vmatprep.subr.mxu0 0.0
    %271 = vmatpush1.msra.mxu0 %v198
    %272 = vmatprep.subr.mxu0 0.0
    %273 = vmatpush1.msra.mxu0 %v197
    %274 = vmatprep.subr.mxu0 0.0
    %275 = vmatpush1.msra.mxu0 %v196
    %276 = vmatprep.subr.mxu0 0.0
    %277 = vmatpush2.msra.mxu0 0.0
    %278 = vmatprep.subr.mxu0 0.0
    %279 = vmatpush2.msra.mxu0 0.0
    %280 = vmatprep.subr.mxu0 0.0
    %281 = vmatpush2.msra.mxu0 0.0
    %282 = vmatprep.subr.mxu0 0.0
    %283 = vmatpush2.msra.mxu0 0.0
    %284 = vmatprep.subr.mxu0 0.0
    %285 = vmatpush2.msra.mxu0 0.0
    %286 = vmatprep.subr.mxu0 0.0
    %287 = vmatpush2.msra.mxu0 0.0
    %288 = vmatprep.subr.mxu0 0.0
    %289 = vmatpush2.msra.mxu0 0.0
    %290 = vmatprep.subr.mxu0 0.0
    %291 = vmatpush2.msra.mxu0 0.0
    %292 = vmatprep.subr.mxu0 0.0
    %293 = vmatpush2.msra.mxu0 0.0
    %294 = vmatprep.subr.mxu0 0.0
    %295 = vmatpush2.msra.mxu0 0.0
    %296 = vmatprep.subr.mxu0 0.0
    %297 = vmatpush2.msra.mxu0 0.0
    %298 = vmatprep.subr.mxu0 0.0
    %299 = vmatpush2.msra.mxu0 0.0
    %300 = vmatprep.subr.mxu0 0.0
    %301 = vmatpush2.msra.mxu0 0.0
    %302 = vmatprep.subr.mxu0 0.0
    %303 = vmatpush2.msra.mxu0 0.0
    %304 = vmatprep.subr.mxu0 0.0
    %305 = vmatpush2.msra.mxu0 0.0
    %306 = vmatprep.subr.mxu0 0.0
    %307 = vmatpush2.msra.mxu0 0.0
    %308 = vmatprep.mubr.f32.mxu0 0.0
    %309 = vmatmul.mubr.f32.gmra.mxu0 %v233
    %v310 = vpop.f32.mrf.mxu0
    %v311 = vadd.f32 %v214, %v310
    %v312 = vpop.f32.mrf.mxu0
    %313 = vmatprep.mubr.f32.mxu0 0.0
    %314 = vmatmul.mubr.f32.gmra.mxu0 %v236
    %v315 = vpop.f32.mrf.mxu0
    %v316 = vadd.f32 %v219, %v315
    %v317 = vpop.f32.mrf.mxu0
    %318 = vmatprep.mubr.f32.mxu0 0.0
    %319 = vmatmul.mubr.f32.gmra.mxu0 %v239
    %v320 = vpop.f32.mrf.mxu0
    %v321 = vadd.f32 %v224, %v320
    %v322 = vpop.f32.mrf.mxu0
    %323 = vmatprep.mubr.f32.mxu0 0.0
    %324 = vmatmul.mubr.f32.gmra.mxu0 %v242
    %v325 = vpop.f32.mrf.mxu0
    %v326 = vadd.f32 %v229, %v325
    %v327 = vpop.f32.mrf.mxu0
    %328 = vdwg.mxu0
    %329 = vst [vmem:[#allocation2] sm:$0xff] %v311
    %330 = vst [vmem:[#allocation2 + $0x8] sm:$0xff] %v316
    %331 = vst [vmem:[#allocation2 + $0x10] sm:$0xff] %v321
    %332 = vst [vmem:[#allocation2 + $0x18] sm:$0xff] %v326
    // Predicated region
    $region22: #{tpu_custom_call.1} parent=1 // pred_check
      _
    $region23: #{tpu_custom_call.1} parent=1 // pred_check_branch
      %334 = sbr.rel (0) target = $region25
    $region24: #{tpu_custom_call.1} parent=1 // pred_region
      %s336 = ssub.s32 512, 512
      %337 = vsyncadd [#allocation3], %s336
      %s338 = sshll.u32 [#allocation2], 4
      %s339 = int_to_ptr.vmem [resolvable:$true] %s338
      %344 = dma.vmem_to_hbm [thread:$0]  %s339, 512, %s5, [#allocation3], 128, 128, 8
    $region25: #{tpu_custom_call.1} parent=1 // pred_fallthru
      _
    // Predicated region
    $region26: #{tpu_custom_call.1} parent=1 // pred_check
      _
    $region27: #{tpu_custom_call.1} parent=1 // pred_check_branch
      %346 = sbr.rel (0) target = $region29
    $region28: #{tpu_custom_call.1} parent=1 // pred_region
      %347 = dma.done [#allocation3], 512
    $region29: #{tpu_custom_call.1} parent=1 // pred_fallthru
      _
    %348 = vsyncpa [#allocation3], 1

</llo_original>
